<compile_context>
chip_gen: v7x
topology: tpu7x:2x2x1
jax: 0.10.0
libtpu: 0.0.40
codegen_flags: <defaults>
</compile_context>

<pallas_src>
import jax
import jax.numpy as jnp
from jax.experimental import pallas as pl
from jax.experimental.pallas import tpu as pltpu


def _hash_head_kernel(x_ref, w1_ref, w2_ref, b2_ref, out1_ref, out2_ref):
    # x_ref:    (tm, in_dim)   VMEM  -- one row-tile of the (flattened) input
    # w1_ref:   (in_dim, nbit) VMEM  -- hash_code weight (transposed torch layout)
    # w2_ref:   (nbit, cls)    VMEM  -- cls_head weight (transposed torch layout)
    # b2_ref:   (1, cls)       VMEM  -- cls_head bias
    # out1_ref: (tm, nbit), out2_ref: (tm, cls)
    h = jnp.tanh(
        jnp.dot(x_ref[...], w1_ref[...], preferred_element_type=jnp.float32)
    )
    h_low = h.astype(out1_ref.dtype)
    out1_ref[...] = h_low
    o2 = jnp.dot(h_low, w2_ref[...], preferred_element_type=jnp.float32)
    out2_ref[...] = (o2 + b2_ref[...].astype(jnp.float32)).astype(out2_ref.dtype)


def _pick_row_block(m, in_dim, nbit, cls, itemsize, target_bytes=2 * 1024 * 1024):
    """Row tile sized so one grid step moves ~target_bytes of HBM traffic."""
    bytes_per_row = max((in_dim + nbit + cls) * itemsize, 1)
    tm = max(target_bytes // bytes_per_row, 8)
    tm = min(tm, 4096)
    if tm >= m:
        # Full-extent block: always layout-legal, single grid step.
        return m
    # Sublane-aligned partial tile (multiple of 8).
    return max((tm // 8) * 8, 8)


def hash_head_forward(x, w_hash, w_cls, b_cls):
    """Fused Hash_head forward: returns (tanh(x @ w_hash), tanh(..) @ w_cls + b)."""
    orig_lead = x.shape[:-1]
    in_dim = x.shape[-1]
    nbit = w_hash.shape[-1]
    cls = w_cls.shape[-1]

    x2 = x.reshape(-1, in_dim)
    m = x2.shape[0]

    tm = _pick_row_block(m, in_dim, nbit, cls, x2.dtype.itemsize)
    grid = (pl.cdiv(m, tm),)

    b2 = b_cls.reshape(1, cls)

    out1, out2 = pl.pallas_call(
        _hash_head_kernel,
        out_shape=(
            jax.ShapeDtypeStruct((m, nbit), x.dtype),
            jax.ShapeDtypeStruct((m, cls), x.dtype),
        ),
        grid=grid,
        in_specs=[
            pl.BlockSpec((tm, in_dim), lambda i: (i, 0)),    # x row-tile
            pl.BlockSpec((in_dim, nbit), lambda i: (0, 0)),  # resident weight 1
            pl.BlockSpec((nbit, cls), lambda i: (0, 0)),     # resident weight 2
            pl.BlockSpec((1, cls), lambda i: (0, 0)),        # resident bias
        ],
        out_specs=(
            pl.BlockSpec((tm, nbit), lambda i: (i, 0)),
            pl.BlockSpec((tm, cls), lambda i: (i, 0)),
        ),
        compiler_params=pltpu.CompilerParams(
            dimension_semantics=("parallel",),
        ),
    )(x2, w_hash, w_cls, b2)

    return (
        out1.reshape(*orig_lead, nbit),
        out2.reshape(*orig_lead, cls),
    )


class HashHead:
    """Mirror of the PyTorch nn.Module: Hash_head(in_dim, nbit, cls).

    Weights are stored transposed relative to torch (in_features, out_features)
    so the kernel computes x @ W directly.
    """

    def __init__(self, in_dim, nbit, cls, *, key, dtype=jnp.float32):
        k1, k2, k3 = jax.random.split(key, 3)
        lim1 = 1.0 / (in_dim ** 0.5)
        lim2 = 1.0 / (nbit ** 0.5)
        self.w_hash = jax.random.uniform(k1, (in_dim, nbit), dtype, -lim1, lim1)
        self.w_cls = jax.random.uniform(k2, (nbit, cls), dtype, -lim2, lim2)
        self.b_cls = jax.random.uniform(k3, (cls,), dtype, -lim2, lim2)

    def __call__(self, x):
        return hash_head_forward(x, self.w_hash, self.w_cls, self.b_cls)


if __name__ == "__main__":
    key = jax.random.PRNGKey(0)
    kx, kw = jax.random.split(key)

    # Small transformer-like activation: batch=2, seq=8, hidden(in_dim)=32.
    in_dim, nbit, cls = 32, 16, 10
    x = jax.random.normal(kx, (2, 8, in_dim), dtype=jnp.float32)

    module = HashHead(in_dim, nbit, cls, key=kw)

    out1, out2 = module(x)
    out1 = jax.block_until_ready(out1)
    out2 = jax.block_until_ready(out2)

    assert out1.shape == (2, 8, nbit), out1.shape
    assert out2.shape == (2, 8, cls), out2.shape

    # Pure-JAX reference for the same weights.
    h_ref = jnp.tanh(x.reshape(-1, in_dim) @ module.w_hash)
    o2_ref = h_ref @ module.w_cls + module.b_cls
    assert jnp.allclose(out1.reshape(-1, nbit), h_ref, atol=1e-5, rtol=1e-5), \
        "out1 mismatch vs reference"
    assert jnp.allclose(out2.reshape(-1, cls), o2_ref, atol=1e-5, rtol=1e-5), \
        "out2 mismatch vs reference"

    print("KERNEL_OK")
</pallas_src>

<mosaic_0001>
module attributes {stable_mosaic.version = 11 : i64} {
  func.func @_hash_head_kernel(%arg0: i32, %arg1: memref<16x32xf32, #tpu.memory_space<vmem>>, %arg2: memref<32x16xf32, #tpu.memory_space<vmem>>, %arg3: memref<16x10xf32, #tpu.memory_space<vmem>>, %arg4: memref<1x10xf32, #tpu.memory_space<vmem>>, %arg5: memref<16x16xf32, #tpu.memory_space<vmem>>, %arg6: memref<16x10xf32, #tpu.memory_space<vmem>>) attributes {dimension_semantics = [#tpu.dimension_semantics<parallel>], iteration_bounds = array<i64: 1>, scalar_prefetch = 0 : i64, scratch_operands = 0 : i64, tpu.core_type = #tpu.core_type<tc>, window_params = [{transform_indices = @transform_0, window_bounds = array<i64: 16, 32>}, {pipeline_mode = #tpu.pipeline_mode<synchronous>, transform_indices = @transform_1, window_bounds = array<i64: 32, 16>}, {pipeline_mode = #tpu.pipeline_mode<synchronous>, transform_indices = @transform_2, window_bounds = array<i64: 16, 10>}, {pipeline_mode = #tpu.pipeline_mode<synchronous>, transform_indices = @transform_3, window_bounds = array<i64: 1, 10>}, {transform_indices = @transform_4, window_bounds = array<i64: 16, 16>}, {transform_indices = @transform_5, window_bounds = array<i64: 16, 10>}]} {
    %c0 = arith.constant 0 : index
    %c0_0 = arith.constant 0 : index
    %0 = vector.load %arg1[%c0, %c0_0] : memref<16x32xf32, #tpu.memory_space<vmem>>, vector<16x32xf32>
    %c0_1 = arith.constant 0 : index
    %c0_2 = arith.constant 0 : index
    %1 = vector.load %arg2[%c0_1, %c0_2] : memref<32x16xf32, #tpu.memory_space<vmem>>, vector<32x16xf32>
    %cst = arith.constant dense<0.000000e+00> : vector<16x16xf32>
    %2 = tpu.matmul %0, %1, %cst {dimension_numbers = #tpu.dot_dimension_numbers<[1], [0], [0], [1], [0, 0, 1, 1], [], []>} : vector<16x32xf32>, vector<32x16xf32>, vector<16x16xf32> -> vector<16x16xf32>
    %3 = math.tanh %2 : vector<16x16xf32>
    %c0_3 = arith.constant 0 : index
    %c0_4 = arith.constant 0 : index
    %4 = vector.load %arg5[%c0_3, %c0_4] : memref<16x16xf32, #tpu.memory_space<vmem>>, vector<16x16xf32>
    tpu.vector_store %arg5[%c0_3, %c0_4], %3 {strides = array<i32>} : memref<16x16xf32, #tpu.memory_space<vmem>>, vector<16x16xf32>,
    %c0_5 = arith.constant 0 : index
    %c0_6 = arith.constant 0 : index
    %5 = vector.load %arg3[%c0_5, %c0_6] : memref<16x10xf32, #tpu.memory_space<vmem>>, vector<16x10xf32>
    %cst_7 = arith.constant dense<0.000000e+00> : vector<16x10xf32>
    %6 = tpu.matmul %3, %5, %cst_7 {dimension_numbers = #tpu.dot_dimension_numbers<[1], [0], [0], [1], [0, 0, 1, 1], [], []>} : vector<16x16xf32>, vector<16x10xf32>, vector<16x10xf32> -> vector<16x10xf32>
    %c0_8 = arith.constant 0 : index
    %c0_9 = arith.constant 0 : index
    %7 = vector.load %arg4[%c0_8, %c0_9] : memref<1x10xf32, #tpu.memory_space<vmem>>, vector<1x10xf32>
    %8 = vector.broadcast %7 : vector<1x10xf32> to vector<16x10xf32>
    %9 = arith.addf %6, %8 : vector<16x10xf32>
    %c0_10 = arith.constant 0 : index
    %c0_11 = arith.constant 0 : index
    %10 = vector.load %arg6[%c0_10, %c0_11] : memref<16x10xf32, #tpu.memory_space<vmem>>, vector<16x10xf32>
    tpu.vector_store %arg6[%c0_10, %c0_11], %9 {strides = array<i32>} : memref<16x10xf32, #tpu.memory_space<vmem>>, vector<16x10xf32>,
    return
  }
  func.func @transform_0(%arg0: i32) -> (i32, i32) {
    %c0_i32 = arith.constant 0 : i32
    %c0_i32_0 = arith.constant 0 : i32
    return %arg0, %c0_i32 : i32, i32
  }
  func.func @transform_1(%arg0: i32) -> (i32, i32) {
    %c0_i32 = arith.constant 0 : i32
    %c0_i32_0 = arith.constant 0 : i32
    %c0_i32_1 = arith.constant 0 : i32
    return %c0_i32, %c0_i32_0 : i32, i32
  }
  func.func @transform_2(%arg0: i32) -> (i32, i32) {
    %c0_i32 = arith.constant 0 : i32
    %c0_i32_0 = arith.constant 0 : i32
    %c0_i32_1 = arith.constant 0 : i32
    return %c0_i32, %c0_i32_0 : i32, i32
  }
  func.func @transform_3(%arg0: i32) -> (i32, i32) {
    %c0_i32 = arith.constant 0 : i32
    %c0_i32_0 = arith.constant 0 : i32
    %c0_i32_1 = arith.constant 0 : i32
    return %c0_i32, %c0_i32_0 : i32, i32
  }
  func.func @transform_4(%arg0: i32) -> (i32, i32) {
    %c0_i32 = arith.constant 0 : i32
    %c0_i32_0 = arith.constant 0 : i32
    return %arg0, %c0_i32 : i32, i32
  }
  func.func @transform_5(%arg0: i32) -> (i32, i32) {
    %c0_i32 = arith.constant 0 : i32
    %c0_i32_0 = arith.constant 0 : i32
    return %arg0, %c0_i32 : i32, i32
  }
}

</mosaic_0001>

<llo_original>
// kernel: tpu_custom_call.1
$region0: #{tpu_custom_call.1}
  #allocation0 [shape = 'u32[]', space=smem, size = 0x4, offset = 0x4, fixed_abs, tag = 'smem constant byte address 0x4 - core index']
  #allocation1 [shape = 'u32[144,128]{1,0:T(1,128)}', space=vmem, size = 0x12000, scoped, tag = 'internal scratch']
  %s0 = inlined_call_operand.vmem [shape: f32[16,32], index: 0, kind: input, shape index: {}]
  %s1 = inlined_call_operand.vmem [shape: f32[32,16], index: 1, kind: input, shape index: {}]
  %s2 = inlined_call_operand.vmem [shape: f32[16,10], index: 2, kind: input, shape index: {}]
  %s3 = inlined_call_operand.vmem [shape: f32[1,10], index: 3, kind: input, shape index: {}]
  %s4 = inlined_call_operand.hbm [shape: f32[16,16], index: 4, kind: output, shape index: {0}]
  %s5 = inlined_call_operand.hbm [shape: f32[16,10], index: 5, kind: output, shape index: {1}]
  %6 = xla_tuple %s4, %s5
  %s7 = sld [smem:[#allocation0]]
  $region34: #{tpu_custom_call.1} parent=0
    _
  %s9 = ssub.s32 1, %s7
  %s10 = scalar_select 0, %s9, %s7
  $region1: #{tpu_custom_call.1} parent=0
    #allocation2 [shape = 'u8[8192]{0}', space=vmem, size = 0x2000, scoped, tag = 'output window, operand 0, single buffered']
    #allocation3 [shape = 's32[1]{0}', space=sflag, size = 0x4, scoped, tag = 'scoped memory for tpu_custom_call.1']
    #allocation4 [shape = 'u8[8192]{0}', space=vmem, size = 0x2000, scoped, tag = 'output window, operand 1, single buffered']
    #allocation5 [shape = 's32[1]{0}', space=sflag, size = 0x4, scoped, tag = 'scoped memory for tpu_custom_call.1']
    %11 = vsyncpa [#allocation3], 0
    %12 = vsyncpa [#allocation5], 0
    // Predicated region
    $region2: #{tpu_custom_call.1} parent=1 // pred_check
      _
    $region3: #{tpu_custom_call.1} parent=1 // pred_check_branch
      %14 = sbr.rel (0) target = $region5
    $region4: #{tpu_custom_call.1} parent=1 // pred_region
      _
    $region5: #{tpu_custom_call.1} parent=1 // pred_fallthru
      _
    // Predicated region
    $region6: #{tpu_custom_call.1} parent=1 // pred_check
      _
    $region7: #{tpu_custom_call.1} parent=1 // pred_check_branch
      %16 = sbr.rel (0) target = $region9
    $region8: #{tpu_custom_call.1} parent=1 // pred_region
      _
    $region9: #{tpu_custom_call.1} parent=1 // pred_fallthru
      _
    // Predicated region
    $region10: #{tpu_custom_call.1} parent=1 // pred_check
      _
    $region11: #{tpu_custom_call.1} parent=1 // pred_check_branch
      %18 = sbr.rel (0) target = $region13
    $region12: #{tpu_custom_call.1} parent=1 // pred_region
      _
    $region13: #{tpu_custom_call.1} parent=1 // pred_fallthru
      _
    // Predicated region
    $region14: #{tpu_custom_call.1} parent=1 // pred_check
      _
    $region15: #{tpu_custom_call.1} parent=1 // pred_check_branch
      %20 = sbr.rel (0) target = $region17
    $region16: #{tpu_custom_call.1} parent=1 // pred_region
      _
    $region17: #{tpu_custom_call.1} parent=1 // pred_fallthru
      _
    %v21 = vld [vmem:[%s0] sm:$0xff]
    %v22 = vld [vmem:[%s0 + $0x8] sm:$0xff]
    %v23 = vld [vmem:[%s1] sm:$0xff]
    %v24 = vld [vmem:[%s1 + $0x8] sm:$0xff]
    %v25 = vld [vmem:[%s1 + $0x10] sm:$0xff]
    %v26 = vld [vmem:[%s1 + $0x18] sm:$0xff]
    %vm27 = vcmask 261120
    %v29 = vsel %vm27, %v21, 0
    %v32 = vsel %vm27, %v22, 0
    %34 = vmatprep.subr.mxu0 0.0
    %35 = vmatpush1.msra.mxu0 %v23
    %36 = vmatprep.subr.mxu0 0.0
    %37 = vmatpush1.msra.mxu0 %v24
    %38 = vmatprep.subr.mxu0 0.0
    %39 = vmatpush1.msra.mxu0 %v25
    %40 = vmatprep.subr.mxu0 0.0
    %41 = vmatpush1.msra.mxu0 %v26
    %42 = vmatprep.subr.mxu0 0.0
    %43 = vmatpush1.msra.mxu0 0.0
    %44 = vmatprep.subr.mxu0 0.0
    %45 = vmatpush1.msra.mxu0 0.0
    %46 = vmatprep.subr.mxu0 0.0
    %47 = vmatpush1.msra.mxu0 0.0
    %48 = vmatprep.subr.mxu0 0.0
    %49 = vmatpush1.msra.mxu0 0.0
    %50 = vmatprep.subr.mxu0 0.0
    %51 = vmatpush1.msra.mxu0 0.0
    %52 = vmatprep.subr.mxu0 0.0
    %53 = vmatpush1.msra.mxu0 0.0
    %54 = vmatprep.subr.mxu0 0.0
    %55 = vmatpush1.msra.mxu0 0.0
    %56 = vmatprep.subr.mxu0 0.0
    %57 = vmatpush1.msra.mxu0 0.0
    %58 = vmatprep.subr.mxu0 0.0
    %59 = vmatpush1.msra.mxu0 0.0
    %60 = vmatprep.subr.mxu0 0.0
    %61 = vmatpush1.msra.mxu0 0.0
    %62 = vmatprep.subr.mxu0 0.0
    %63 = vmatpush1.msra.mxu0 0.0
    %64 = vmatprep.subr.mxu0 0.0
    %65 = vmatpush1.msra.mxu0 0.0
    %66 = vmatprep.subr.mxu0 0.0
    %67 = vmatpush1.msra.mxu0 0.0
    %68 = vmatprep.subr.mxu0 0.0
    %69 = vmatpush1.msra.mxu0 0.0
    %70 = vmatprep.subr.mxu0 0.0
    %71 = vmatpush1.msra.mxu0 0.0
    %72 = vmatprep.subr.mxu0 0.0
    %73 = vmatpush1.msra.mxu0 0.0
    %74 = vmatprep.subr.mxu0 0.0
    %75 = vmatpush1.msra.mxu0 0.0
    %76 = vmatprep.subr.mxu0 0.0
    %77 = vmatpush1.msra.mxu0 0.0
    %78 = vmatprep.subr.mxu0 0.0
    %79 = vmatpush1.msra.mxu0 0.0
    %80 = vmatprep.subr.mxu0 0.0
    %81 = vmatpush1.msra.mxu0 0.0
    %82 = vmatprep.subr.mxu0 0.0
    %83 = vmatpush1.msra.mxu0 0.0
    %84 = vmatprep.subr.mxu0 0.0
    %85 = vmatpush1.msra.mxu0 0.0
    %86 = vmatprep.subr.mxu0 0.0
    %87 = vmatpush1.msra.mxu0 0.0
    %88 = vmatprep.subr.mxu0 0.0
    %89 = vmatpush1.msra.mxu0 0.0
    %90 = vmatprep.subr.mxu0 0.0
    %91 = vmatpush1.msra.mxu0 0.0
    %92 = vmatprep.subr.mxu0 0.0
    %93 = vmatpush1.msra.mxu0 0.0
    %94 = vmatprep.subr.mxu0 0.0
    %95 = vmatpush1.msra.mxu0 0.0
    %96 = vmatprep.subr.mxu0 0.0
    %97 = vmatpush1.msra.mxu0 0.0
    %98 = vmatprep.mubr.f32.mxu0 0.0
    %99 = vmatmul.mubr.f32.gmra.mrb[0].mxu0 %v29
    %v100 = vpop.f32.mrb[0].mxu0
    %v101 = vadd.f32 0.0, %v100
    %v102 = vpop.f32.mrb[0].mxu0
    %103 = vmatprep.mubr.f32.mxu0 0.0
    %104 = vmatmul.mubr.f32.gmra.mrb[0].mxu0 %v32
    %v105 = vpop.f32.mrb[0].mxu0
    %v106 = vadd.f32 0.0, %v105
    %v107 = vpop.f32.mrb[0].mxu0
    %108 = vdwg.mxu0
    %v109 = vtanh.pop %v101
    %v110 = vtanh.pop %v106
    %vm111 = vcmask 130048
    %112 = vst.msk [vmem:[#allocation2] sm:$0xff] %vm111, %v109
    %113 = vst.msk [vmem:[#allocation2 + $0x8] sm:$0xff] %vm111, %v110
    %v114 = vld [vmem:[%s2] sm:$0xff]
    %v115 = vld [vmem:[%s2 + $0x8] sm:$0xff]
    %v116 = vld [vmem:[%s3] sm:$0x1]
    %v118 = vlaneseq
    %v119 = vshrl.u32 %v118, 7
    %v120 = vsub.s32 0, %v119
    %v121 = vrot.slane %v116, %v120
    %v124 = vsel %vm111, %v109, 0
    %v127 = vsel %vm111, %v110, 0
    %129 = vmatprep.subr.mxu0 0.0
    %130 = vmatpush1.msra.mxu0 %v114
    %131 = vmatprep.subr.mxu0 0.0
    %132 = vmatpush1.msra.mxu0 %v115
    %133 = vmatprep.subr.mxu0 0.0
    %134 = vmatpush1.msra.mxu0 0.0
    %135 = vmatprep.subr.mxu0 0.0
    %136 = vmatpush1.msra.mxu0 0.0
    %137 = vmatprep.subr.mxu0 0.0
    %138 = vmatpush1.msra.mxu0 0.0
    %139 = vmatprep.subr.mxu0 0.0
    %140 = vmatpush1.msra.mxu0 0.0
    %141 = vmatprep.subr.mxu0 0.0
    %142 = vmatpush1.msra.mxu0 0.0
    %143 = vmatprep.subr.mxu0 0.0
    %144 = vmatpush1.msra.mxu0 0.0
    %145 = vmatprep.subr.mxu0 0.0
    %146 = vmatpush1.msra.mxu0 0.0
    %147 = vmatprep.subr.mxu0 0.0
    %148 = vmatpush1.msra.mxu0 0.0
    %149 = vmatprep.subr.mxu0 0.0
    %150 = vmatpush1.msra.mxu0 0.0
    %151 = vmatprep.subr.mxu0 0.0
    %152 = vmatpush1.msra.mxu0 0.0
    %153 = vmatprep.subr.mxu0 0.0
    %154 = vmatpush1.msra.mxu0 0.0
    %155 = vmatprep.subr.mxu0 0.0
    %156 = vmatpush1.msra.mxu0 0.0
    %157 = vmatprep.subr.mxu0 0.0
    %158 = vmatpush1.msra.mxu0 0.0
    %159 = vmatprep.subr.mxu0 0.0
    %160 = vmatpush1.msra.mxu0 0.0
    %161 = vmatprep.subr.mxu0 0.0
    %162 = vmatpush1.msra.mxu0 0.0
    %163 = vmatprep.subr.mxu0 0.0
    %164 = vmatpush1.msra.mxu0 0.0
    %165 = vmatprep.subr.mxu0 0.0
    %166 = vmatpush1.msra.mxu0 0.0
    %167 = vmatprep.subr.mxu0 0.0
    %168 = vmatpush1.msra.mxu0 0.0
    %169 = vmatprep.subr.mxu0 0.0
    %170 = vmatpush1.msra.mxu0 0.0
    %171 = vmatprep.subr.mxu0 0.0
    %172 = vmatpush1.msra.mxu0 0.0
    %173 = vmatprep.subr.mxu0 0.0
    %174 = vmatpush1.msra.mxu0 0.0
    %175 = vmatprep.subr.mxu0 0.0
    %176 = vmatpush1.msra.mxu0 0.0
    %177 = vmatprep.subr.mxu0 0.0
    %178 = vmatpush1.msra.mxu0 0.0
    %179 = vmatprep.subr.mxu0 0.0
    %180 = vmatpush1.msra.mxu0 0.0
    %181 = vmatprep.subr.mxu0 0.0
    %182 = vmatpush1.msra.mxu0 0.0
    %183 = vmatprep.subr.mxu0 0.0
    %184 = vmatpush1.msra.mxu0 0.0
    %185 = vmatprep.subr.mxu0 0.0
    %186 = vmatpush1.msra.mxu0 0.0
    %187 = vmatprep.subr.mxu0 0.0
    %188 = vmatpush1.msra.mxu0 0.0
    %189 = vmatprep.subr.mxu0 0.0
    %190 = vmatpush1.msra.mxu0 0.0
    %191 = vmatprep.subr.mxu0 0.0
    %192 = vmatpush1.msra.mxu0 0.0
    %193 = vmatprep.mubr.f32.mxu0 0.0
    %194 = vmatmul.mubr.f32.gmra.mrb[0].mxu0 %v124
    %v195 = vpop.f32.mrb[0].mxu0
    %v196 = vadd.f32 %v121, %v195
    %v197 = vpop.f32.mrb[0].mxu0
    %198 = vmatprep.mubr.f32.mxu0 0.0
    %199 = vmatmul.mubr.f32.gmra.mrb[0].mxu0 %v127
    %v200 = vpop.f32.mrb[0].mxu0
    %v201 = vadd.f32 %v121, %v200
    %v202 = vpop.f32.mrb[0].mxu0
    %203 = vdwg.mxu0
    %vm204 = vcmask 80896
    %205 = vst.msk [vmem:[#allocation4] sm:$0xff] %vm204, %v196
    %206 = vst.msk [vmem:[#allocation4 + $0x8] sm:$0xff] %vm204, %v201
    // Predicated region
    $region18: #{tpu_custom_call.1} parent=1 // pred_check
      _
    $region19: #{tpu_custom_call.1} parent=1 // pred_check_branch
      %208 = sbr.rel (0) target = $region21
    $region20: #{tpu_custom_call.1} parent=1 // pred_region
      %s210 = ssub.s32 256, 256
      %211 = vsyncadd [#allocation3], %s210
      %s212 = sshll.u32 [#allocation2], 4
      %s213 = int_to_ptr.vmem [resolvable:$true] %s212
      %218 = dma.vmem_to_hbm [thread:$0]  %s213, 256, %s4, [#allocation3], 128, 128, 8
    $region21: #{tpu_custom_call.1} parent=1 // pred_fallthru
      _
    // Predicated region
    $region22: #{tpu_custom_call.1} parent=1 // pred_check
      _
    $region23: #{tpu_custom_call.1} parent=1 // pred_check_branch
      %220 = sbr.rel (0) target = $region25
    $region24: #{tpu_custom_call.1} parent=1 // pred_region
      %s222 = ssub.s32 256, 256
      %223 = vsyncadd [#allocation5], %s222
      %s224 = sshll.u32 [#allocation4], 4
      %s225 = int_to_ptr.vmem [resolvable:$true] %s224
      %230 = dma.vmem_to_hbm [thread:$0]  %s225, 256, %s5, [#allocation5], 128, 128, 8
    $region25: #{tpu_custom_call.1} parent=1 // pred_fallthru
      _
    // Predicated region
    $region26: #{tpu_custom_call.1} parent=1 // pred_check
      _
    $region27: #{tpu_custom_call.1} parent=1 // pred_check_branch
      %232 = sbr.rel (0) target = $region29
    $region28: #{tpu_custom_call.1} parent=1 // pred_region
      %233 = dma.done [#allocation3], 256
    $region29: #{tpu_custom_call.1} parent=1 // pred_fallthru
      _
    // Predicated region
    $region30: #{tpu_custom_call.1} parent=1 // pred_check
      _
    $region31: #{tpu_custom_call.1} parent=1 // pred_check_branch
      %235 = sbr.rel (0) target = $region33
    $region32: #{tpu_custom_call.1} parent=1 // pred_region
      %236 = dma.done [#allocation5], 256
    $region33: #{tpu_custom_call.1} parent=1 // pred_fallthru
      _
    %237 = vsyncpa [#allocation3], 1
    %238 = vsyncpa [#allocation5], 1

</llo_original>
